<compile_context>
chip_gen: v7x
topology: tpu7x:2x2x1
jax: 0.10.0
libtpu: 0.0.40
codegen_flags: <defaults>
</compile_context>

<pallas_src>
import functools

import jax
import jax.numpy as jnp
from jax.experimental import pallas as pl
from jax.experimental.pallas import tpu as pltpu

_LANES = 128
_VALID_LOSS_TYPES = ("sigmoid", "hinge", "ipo", "kto_pair")


def _log_sigmoid(x):
    # numerically stable logsigmoid(x) = min(x, 0) - log1p(exp(-|x|))
    return jnp.minimum(x, 0.0) - jnp.log1p(jnp.exp(-jnp.abs(x)))


def _dpo_kernel(x_ref, o_ref, *, beta, label_smoothing, loss_type, rows, batch):
    # x_ref: (4*rows, 128) = stacked [policy_chosen, policy_rejected,
    #                                 reference_chosen, reference_rejected],
    # each tensor occupying `rows` consecutive sublane-rows (zero padded).
    pc = x_ref[0 * rows:1 * rows, :]
    pr = x_ref[1 * rows:2 * rows, :]
    rc = x_ref[2 * rows:3 * rows, :]
    rr = x_ref[3 * rows:4 * rows, :]

    pi_logratios = pc - pr
    ref_logratios = rc - rr
    logits = pi_logratios - ref_logratios

    chosen_logratios = pc - rc
    rejected_logratios = pr - rr

    if loss_type == "sigmoid":
        if label_smoothing == 0.0:
            losses = -_log_sigmoid(beta * logits)
        else:
            losses = (-_log_sigmoid(beta * logits) * (1.0 - label_smoothing)
                      - _log_sigmoid(-beta * logits) * label_smoothing)
        o_ref[0 * rows:1 * rows, :] = losses
        out_off = 1
    elif loss_type == "hinge":
        o_ref[0 * rows:1 * rows, :] = jnp.maximum(1.0 - beta * logits, 0.0)
        out_off = 1
    elif loss_type == "ipo":
        o_ref[0 * rows:1 * rows, :] = (logits - 1.0 / (2.0 * beta)) ** 2
        out_off = 1
    else:  # "kto_pair" (validated in the wrapper)
        # Padded lanes hold zeros in all inputs, so their logratios are 0 and
        # do not perturb the sum; divide by the true batch size.
        inv_b = 1.0 / float(batch)
        chosen_kl = jnp.maximum(jnp.sum(chosen_logratios) * inv_b, 0.0)
        rejected_kl = jnp.maximum(jnp.sum(rejected_logratios) * inv_b, 0.0)
        first = 1.0 - jax.nn.sigmoid(beta * (chosen_logratios - rejected_kl))
        second = 1.0 - jax.nn.sigmoid(beta * (chosen_kl - rejected_logratios))
        # Two lane-aligned row-block stores instead of a lane-axis concat.
        o_ref[0 * rows:1 * rows, :] = first
        o_ref[1 * rows:2 * rows, :] = second
        out_off = 2

    # chosen / rejected rewards (forward values; torch .detach() only affects
    # gradients — no VJP is defined for this kernel).
    o_ref[(out_off + 0) * rows:(out_off + 1) * rows, :] = beta * chosen_logratios
    o_ref[(out_off + 1) * rows:(out_off + 2) * rows, :] = beta * rejected_logratios


def dpo_loss(policy_chosen_logps,
             policy_rejected_logps,
             reference_chosen_logps,
             reference_rejected_logps,
             *,
             beta: float = 0.1,
             label_smoothing: float = 0.0,
             loss_type: str = "sigmoid"):
    """Pallas-TPU implementation of torchtune DPOLoss.forward."""
    if loss_type not in _VALID_LOSS_TYPES:
        raise ValueError(
            f"Unknown loss type: {loss_type}. Should be one of {list(_VALID_LOSS_TYPES)}")

    b = policy_chosen_logps.shape[0]
    dtype = jnp.float32

    # Pad batch to a multiple of 128 and lay it out as (rows, 128): lane-dense
    # loads/stores, full 128-lane vreg utilization.
    bp = max(_LANES, ((b + _LANES - 1) // _LANES) * _LANES)
    rows = bp // _LANES

    def pack(x):
        x = x.astype(dtype)
        if bp != b:
            x = jnp.pad(x, (0, bp - b))
        return x.reshape(rows, _LANES)

    # One stacked input -> one input DMA.
    x = jnp.concatenate(
        [pack(policy_chosen_logps), pack(policy_rejected_logps),
         pack(reference_chosen_logps), pack(reference_rejected_logps)],
        axis=0)  # (4*rows, 128)

    n_out = 4 if loss_type == "kto_pair" else 3  # rows of packed output

    kernel = functools.partial(_dpo_kernel,
                               beta=float(beta),
                               label_smoothing=float(label_smoothing),
                               loss_type=loss_type,
                               rows=rows,
                               batch=b)

    out = pl.pallas_call(
        kernel,
        out_shape=jax.ShapeDtypeStruct((n_out * rows, _LANES), dtype),
        grid=(),
        in_specs=[pl.BlockSpec((4 * rows, _LANES), lambda: (0, 0),
                               memory_space=pltpu.VMEM)],
        out_specs=pl.BlockSpec((n_out * rows, _LANES), lambda: (0, 0),
                               memory_space=pltpu.VMEM),
    )(x)

    def unrow(i):  # row-block i of the packed output -> (b,) vector
        return out[i * rows:(i + 1) * rows, :].reshape(bp)[:b]

    if loss_type == "kto_pair":
        losses = jnp.concatenate([unrow(0), unrow(1)], axis=0)  # matches torch.cat dim 0
        return losses, unrow(2), unrow(3)
    return unrow(0), unrow(1), unrow(2)


def _reference_dpo(pc, pr, rc, rr, beta, label_smoothing, loss_type):
    """Pure-JAX reference mirroring the PyTorch module."""
    pi_logratios = pc - pr
    ref_logratios = rc - rr
    logits = pi_logratios - ref_logratios
    if loss_type == "sigmoid":
        losses = (-jax.nn.log_sigmoid(beta * logits) * (1 - label_smoothing)
                  - jax.nn.log_sigmoid(-beta * logits) * label_smoothing)
    elif loss_type == "hinge":
        losses = jnp.maximum(1 - beta * logits, 0.0)
    elif loss_type == "ipo":
        losses = (logits - 1 / (2 * beta)) ** 2
    elif loss_type == "kto_pair":
        chosen_kl = jnp.maximum(jnp.mean(pc - rc), 0.0)
        rejected_kl = jnp.maximum(jnp.mean(pr - rr), 0.0)
        losses = jnp.concatenate(
            [1 - jax.nn.sigmoid(beta * ((pc - rc) - rejected_kl)),
             1 - jax.nn.sigmoid(beta * (chosen_kl - (pr - rr)))], 0)
    chosen_rewards = beta * (pc - rc)
    rejected_rewards = beta * (pr - rr)
    return losses, chosen_rewards, rejected_rewards


if __name__ == "__main__":
    batch = 8
    key = jax.random.PRNGKey(0)
    k1, k2, k3, k4 = jax.random.split(key, 4)
    # log-probs are negative; scale to plausible magnitudes
    policy_chosen = -jnp.abs(jax.random.normal(k1, (batch,), jnp.float32)) * 5.0
    policy_rejected = -jnp.abs(jax.random.normal(k2, (batch,), jnp.float32)) * 5.0
    ref_chosen = -jnp.abs(jax.random.normal(k3, (batch,), jnp.float32)) * 5.0
    ref_rejected = -jnp.abs(jax.random.normal(k4, (batch,), jnp.float32)) * 5.0

    configs = [
        ("sigmoid", 0.1, 0.0),
        ("sigmoid", 0.1, 0.1),   # exercise the label-smoothing path too
        ("hinge", 0.1, 0.0),
        ("ipo", 0.1, 0.0),
        ("kto_pair", 0.1, 0.0),
    ]

    ok = True
    for loss_type, beta, ls in configs:
        out = dpo_loss(policy_chosen, policy_rejected, ref_chosen, ref_rejected,
                       beta=beta, label_smoothing=ls, loss_type=loss_type)
        out = jax.block_until_ready(out)
        ref = _reference_dpo(policy_chosen, policy_rejected, ref_chosen,
                             ref_rejected, beta, ls, loss_type)
        for a, b_ in zip(out, ref):
            if a.shape != b_.shape or not jnp.allclose(a, b_, atol=1e-5, rtol=1e-5):
                ok = False

    if ok:
        print("KERNEL_OK")
    else:
        print("KERNEL_MISMATCH")
</pallas_src>

<mosaic_0001>
module attributes {stable_mosaic.version = 11 : i64} {
  func.func @_dpo_kernel(%arg0: memref<4x128xf32, #tpu.memory_space<vmem>>, %arg1: memref<3x128xf32, #tpu.memory_space<vmem>>) attributes {dimension_semantics = [], scalar_prefetch = 0 : i64, scratch_operands = 0 : i64, tpu.core_type = #tpu.core_type<tc>} {
    %c0 = arith.constant 0 : index
    %c0_0 = arith.constant 0 : index
    %0 = vector.load %arg0[%c0, %c0_0] : memref<4x128xf32, #tpu.memory_space<vmem>>, vector<1x128xf32>
    %c1 = arith.constant 1 : index
    %c0_1 = arith.constant 0 : index
    %1 = vector.load %arg0[%c1, %c0_1] : memref<4x128xf32, #tpu.memory_space<vmem>>, vector<1x128xf32>
    %c2 = arith.constant 2 : index
    %c0_2 = arith.constant 0 : index
    %2 = vector.load %arg0[%c2, %c0_2] : memref<4x128xf32, #tpu.memory_space<vmem>>, vector<1x128xf32>
    %c3 = arith.constant 3 : index
    %c0_3 = arith.constant 0 : index
    %3 = vector.load %arg0[%c3, %c0_3] : memref<4x128xf32, #tpu.memory_space<vmem>>, vector<1x128xf32>
    %4 = arith.subf %0, %1 : vector<1x128xf32>
    %5 = arith.subf %2, %3 : vector<1x128xf32>
    %6 = arith.subf %4, %5 : vector<1x128xf32>
    %7 = arith.subf %0, %2 : vector<1x128xf32>
    %8 = arith.subf %1, %3 : vector<1x128xf32>
    %cst = arith.constant 1.000000e-01 : f32
    %9 = vector.broadcast %cst : f32 to vector<1x128xf32>
    %10 = arith.mulf %9, %6 : vector<1x128xf32>
    %cst_4 = arith.constant 0.000000e+00 : f32
    %11 = vector.broadcast %cst_4 : f32 to vector<1x128xf32>
    %12 = arith.minimumf %10, %11 : vector<1x128xf32>
    %13 = math.absf %10 : vector<1x128xf32>
    %cst_5 = arith.constant 0.000000e+00 : f32
    %14 = vector.broadcast %cst_5 : f32 to vector<1x128xf32>
    %15 = arith.subf %14, %13 : vector<1x128xf32>
    %16 = math.exp %15 : vector<1x128xf32>
    %17 = math.log1p %16 : vector<1x128xf32>
    %18 = arith.subf %12, %17 : vector<1x128xf32>
    %cst_6 = arith.constant 0.000000e+00 : f32
    %19 = vector.broadcast %cst_6 : f32 to vector<1x128xf32>
    %20 = arith.subf %19, %18 : vector<1x128xf32>
    %c0_7 = arith.constant 0 : index
    %c0_8 = arith.constant 0 : index
    %21 = vector.load %arg1[%c0_7, %c0_8] : memref<3x128xf32, #tpu.memory_space<vmem>>, vector<1x128xf32>
    tpu.vector_store %arg1[%c0_7, %c0_8], %20 {strides = array<i32>} : memref<3x128xf32, #tpu.memory_space<vmem>>, vector<1x128xf32>,
    %cst_9 = arith.constant 1.000000e-01 : f32
    %22 = vector.broadcast %cst_9 : f32 to vector<1x128xf32>
    %23 = arith.mulf %22, %7 : vector<1x128xf32>
    %c1_10 = arith.constant 1 : index
    %c0_11 = arith.constant 0 : index
    %24 = vector.load %arg1[%c1_10, %c0_11] : memref<3x128xf32, #tpu.memory_space<vmem>>, vector<1x128xf32>
    tpu.vector_store %arg1[%c1_10, %c0_11], %23 {strides = array<i32>} : memref<3x128xf32, #tpu.memory_space<vmem>>, vector<1x128xf32>,
    %cst_12 = arith.constant 1.000000e-01 : f32
    %25 = vector.broadcast %cst_12 : f32 to vector<1x128xf32>
    %26 = arith.mulf %25, %8 : vector<1x128xf32>
    %c2_13 = arith.constant 2 : index
    %c0_14 = arith.constant 0 : index
    %27 = vector.load %arg1[%c2_13, %c0_14] : memref<3x128xf32, #tpu.memory_space<vmem>>, vector<1x128xf32>
    tpu.vector_store %arg1[%c2_13, %c0_14], %26 {strides = array<i32>} : memref<3x128xf32, #tpu.memory_space<vmem>>, vector<1x128xf32>,
    return
  }
}

</mosaic_0001>

<llo_original>
// kernel: tpu_custom_call.1
$region0: #{tpu_custom_call.1}
  #allocation0 [shape = 'u32[]', space=smem, size = 0x4, offset = 0x4, fixed_abs, tag = 'smem constant byte address 0x4 - core index']
  #allocation1 [shape = 'u32[144,128]{1,0:T(1,128)}', space=vmem, size = 0x12000, scoped, tag = 'internal scratch']
  %s0 = inlined_call_operand.hbm [shape: f32[4,128], index: 0, kind: input, shape index: {}]
  %s1 = inlined_call_operand.hbm [shape: f32[3,128], index: 1, kind: output, shape index: {}]
  %s2 = sld [smem:[#allocation0]]
  $region18: #{tpu_custom_call.1} parent=0
    _
  %s4 = ssub.s32 1, %s2
  %s5 = scalar_select 0, %s4, %s2
  $region1: #{tpu_custom_call.1} parent=0
    #allocation2 [shape = 'u8[2048]{0}', space=vmem, size = 0x800, scoped, tag = 'input window, operand 0, single buffered']
    #allocation3 [shape = 's32[1]{0}', space=sflag, size = 0x4, scoped, tag = 'scoped memory for tpu_custom_call.1']
    #allocation4 [shape = 's32[1]{0}', space=sflag, size = 0x4, scoped, tag = 'scoped memory for tpu_custom_call.1']
    #allocation5 [shape = 'u8[2048]{0}', space=vmem, size = 0x800, scoped, tag = 'output window, operand 0, single buffered']
    %6 = vsyncpa [#allocation3], 0
    %7 = vsyncpa [#allocation4], 0
    // Predicated region
    $region2: #{tpu_custom_call.1} parent=1 // pred_check
      _
    $region3: #{tpu_custom_call.1} parent=1 // pred_check_branch
      %9 = sbr.rel (0) target = $region5
    $region4: #{tpu_custom_call.1} parent=1 // pred_region
      %s11 = ssub.s32 64, 64
      %12 = vsyncadd [#allocation3], %s11
      %s14 = sshll.u32 [#allocation2], 4
      %s15 = int_to_ptr.vmem [resolvable:$true] %s14
      %17 = dma.hbm_to_vmem [thread:$0]  %s0, 64, %s15, [#allocation3]
    $region5: #{tpu_custom_call.1} parent=1 // pred_fallthru
      _
    // Predicated region
    $region6: #{tpu_custom_call.1} parent=1 // pred_check
      _
    $region7: #{tpu_custom_call.1} parent=1 // pred_check_branch
      %19 = sbr.rel (0) target = $region9
    $region8: #{tpu_custom_call.1} parent=1 // pred_region
      %20 = dma.done [#allocation3], 64
    $region9: #{tpu_custom_call.1} parent=1 // pred_fallthru
      _
    %v21 = vld [vmem:[#allocation2] sm:$0x1]
    %v22 = vld [vmem:[#allocation2 + $0x1] sm:$0x1]
    %v23 = vld [vmem:[#allocation2 + $0x2] sm:$0x1]
    %v24 = vld [vmem:[#allocation2 + $0x3] sm:$0x1]
    %v25 = vsub.f32 %v21, %v22
    %v26 = vsub.f32 %v23, %v24
    %v27 = vsub.f32 %v25, %v26
    %v28 = vsub.f32 %v21, %v23
    %v29 = vsub.f32 %v22, %v24
    %v30 = vmul.f32 %v27, 0.1
    %v31 = vmin.f32 %v30, 0.0
    %v32 = vand.u32 2147483647, %v30
    %v33 = vsub.f32 0.0, %v32
    %v34 = vmul.f32 %v33, 1.442695
    %v35 = vpow.pop %v34
    %v36 = vadd.f32 %v35, 1.0
    %v37 = vlog2.pop %v36
    %v38 = vmul.f32 %v37, 0.6931472
    %v39 = vmul.f32 -0.5, %v35
    %v40 = vadd.f32 %v39, 1.0
    %v41 = vmul.f32 %v40, %v35
    %v42 = vand.u32 2147483647, %v35
    %vm43 = vcmp.lt.f32.partialorder %v42, 0.0004427343
    %v44 = vsel %vm43, %v41, %v38
    %v45 = vsub.f32 %v31, %v44
    %v46 = vsub.f32 0.0, %v45
    %47 = vst [vmem:[#allocation5] sm:$0x1] %v46
    %v48 = vmul.f32 %v28, 0.1
    %49 = vst [vmem:[#allocation5 + $0x1] sm:$0x1] %v48
    %v50 = vmul.f32 %v29, 0.1
    %51 = vst [vmem:[#allocation5 + $0x2] sm:$0x1] %v50
    // Predicated region
    $region10: #{tpu_custom_call.1} parent=1 // pred_check
      _
    $region11: #{tpu_custom_call.1} parent=1 // pred_check_branch
      %53 = sbr.rel (0) target = $region13
    $region12: #{tpu_custom_call.1} parent=1 // pred_region
      %s55 = ssub.s32 64, 64
      %56 = vsyncadd [#allocation4], %s55
      %s58 = sshll.u32 [#allocation5], 4
      %s59 = int_to_ptr.vmem [resolvable:$true] %s58
      %61 = dma.vmem_to_hbm [thread:$0]  %s59, 64, %s1, [#allocation4]
    $region13: #{tpu_custom_call.1} parent=1 // pred_fallthru
      _
    // Predicated region
    $region14: #{tpu_custom_call.1} parent=1 // pred_check
      _
    $region15: #{tpu_custom_call.1} parent=1 // pred_check_branch
      %63 = sbr.rel (0) target = $region17
    $region16: #{tpu_custom_call.1} parent=1 // pred_region
      %64 = dma.done [#allocation4], 64
    $region17: #{tpu_custom_call.1} parent=1 // pred_fallthru
      _
    %65 = vsyncpa [#allocation3], 1
    %66 = vsyncpa [#allocation4], 1

</llo_original>
